<compile_context>
chip_gen: v7x
topology: tpu7x:2x2x1
jax: 0.10.0
libtpu: 0.0.40
codegen_flags: <defaults>
</compile_context>

<pallas_src>
import functools

import jax
import jax.numpy as jnp
from jax.experimental import pallas as pl
from jax.experimental.pallas import tpu as pltpu

EPS = 1e-5


# ---------------------------------------------------------------------------
# Kernels
# ---------------------------------------------------------------------------

def _fused_kernel(x_ref, params_ref, o_ref, *, c_half, tc, true_hw, true_n):
    """Single-pass BN/IN: stats + normalize on one (N, tc, HWp) channel tile."""
    x = x_ref[...].astype(jnp.float32)                        # (N, tc, HWp)

    # Zero padding (if any) contributes 0 to both sums; divide by TRUE element counts.
    s1 = jnp.sum(x, axis=2, keepdims=True)                    # (N, tc, 1)
    s2 = jnp.sum(x * x, axis=2, keepdims=True)                # (N, tc, 1)

    inv_hw = 1.0 / true_hw
    mean_in = s1 * inv_hw                                     # InstanceNorm stats (per n, c)
    var_in = s2 * inv_hw - mean_in * mean_in

    inv_nhw = 1.0 / (true_n * true_hw)
    mean_bn = jnp.sum(s1, axis=0, keepdims=True) * inv_nhw    # BatchNorm stats (1, tc, 1)
    var_bn = jnp.sum(s2, axis=0, keepdims=True) * inv_nhw - mean_bn * mean_bn

    # BN/IN selector computed in-kernel (no mask operand / DMA).
    ch = pl.program_id(0) * tc + jax.lax.broadcasted_iota(jnp.int32, (1, tc, 1), 1)
    m = (ch < c_half).astype(jnp.float32)                     # 1.0 -> BatchNorm channel

    mean = m * mean_bn + (1.0 - m) * mean_in                  # (N, tc, 1)
    var = jnp.maximum(m * var_bn + (1.0 - m) * var_in, 0.0)   # clamp E[x^2]-mean^2 rounding

    params = params_ref[...]                                  # (2, tc, 1)
    gamma = params[0:1]
    beta = params[1:2]
    scale = gamma * jax.lax.rsqrt(var + EPS)
    shift = beta - mean * scale
    o_ref[...] = (x * scale + shift).astype(o_ref.dtype)


def _stats_kernel(x_ref, s1_ref, s2_ref):
    """Two-phase pass 1: accumulate per-(n, c) sums over HW tiles (reduction axis last)."""
    @pl.when(pl.program_id(1) == 0)
    def _():
        s1_ref[...] = jnp.zeros_like(s1_ref)
        s2_ref[...] = jnp.zeros_like(s2_ref)

    x = x_ref[...].astype(jnp.float32)                        # (N, tc, thw)
    s1_ref[...] += jnp.sum(x, axis=2, keepdims=True)
    s2_ref[...] += jnp.sum(x * x, axis=2, keepdims=True)


def _apply_kernel(x_ref, ss_ref, o_ref):
    """Two-phase pass 2: elementwise x*scale + shift."""
    x = x_ref[...].astype(jnp.float32)                        # (N, tc, thw)
    ss = ss_ref[...]                                          # (2, N, tc, 1)
    o_ref[...] = (x * ss[0] + ss[1]).astype(o_ref.dtype)


# ---------------------------------------------------------------------------
# Planning helpers
# ---------------------------------------------------------------------------

def _round_up(x, m):
    return (x + m - 1) // m * m


def _vmem_limit_bytes():
    """~75% of physical VMEM: 96 MiB on 128 MiB parts (v5e/v6e), 48 MiB on v7x."""
    cap = None
    try:
        cap = getattr(pltpu.get_tpu_info(), "vmem_capacity_bytes", None)
    except Exception:
        cap = None
    if not cap:
        cap = 64 * 1024 * 1024          # conservative (v7x-sized) default
    return int(cap) * 3 // 4


def _aligned_channel_tiles(C):
    """Channel tiles keeping (N, tc, ...) blocks sublane-legal: multiples of 8, or the full C."""
    return [t for t in range(C, 0, -1) if C % t == 0 and (t % 8 == 0 or t == C)]


def _block_bytes(n, tc, hw, elem_bytes):
    # Double-buffered input + output blocks plus ~3 full-size f32 temporaries
    # (f32 upcast of x, x*x, f32 result before the output cast).
    return n * tc * hw * (4 * elem_bytes + 3 * 4)


def _plan(N, C, HWp, elem_bytes, budget_bytes):
    """Return ("fused", tc, HWp) or ("two_phase", tc, thw)."""
    tiles = _aligned_channel_tiles(C)
    multi = [t for t in tiles if C // t >= 2]   # >=2 grid steps -> feeds both v7x TensorCores

    # Fused single-pass path: full-HW slab per channel tile.
    for cand in (multi, tiles):
        for t in cand:
            if _block_bytes(N, t, HWp, elem_bytes) <= budget_bytes:
                return ("fused", t, HWp)

    # HW-blocked two-phase path.
    tc = None
    for cand in (multi, tiles):
        for t in cand:
            if _block_bytes(N, t, 128, elem_bytes) <= budget_bytes:
                tc = t
                break
        if tc is not None:
            break
    if tc is None:
        tc = tiles[-1]                           # best effort
    thw = 128
    n128 = max(HWp // 128, 1)
    for d in range(n128, 0, -1):
        if n128 % d == 0 and _block_bytes(N, tc, 128 * d, elem_bytes) <= budget_bytes:
            thw = 128 * d
            break
    return ("two_phase", tc, thw)


# ---------------------------------------------------------------------------
# Wrapper
# ---------------------------------------------------------------------------

def combine_norm2d(x, bn_weight, bn_bias, in_weight, in_bias, *, budget_bytes=None):
    """x: (N, C, H, W) NCHW.  Returns (N, C, H, W)."""
    N, C, H, W = x.shape
    assert C % 2 == 0, "CombineNorm2d requires an even channel count"
    c_half = C // 2
    HW = H * W
    elem_bytes = jnp.dtype(x.dtype).itemsize

    vmem_limit = _vmem_limit_bytes()
    if budget_bytes is None:
        budget_bytes = int(vmem_limit * 0.8)

    # Lane-dense spatial axis: pad HW to a multiple of 128 when the masked-store waste would be
    # large; zero padding leaves the sums (and thus the statistics) unchanged.
    if HW % 128 == 0:
        HWp = HW
    elif HW < 1024:
        HWp = _round_up(HW, 128)
    else:
        HWp = HW                                  # tail waste small, skip the extra pad copy

    mode, tc, thw = _plan(N, C, HWp, elem_bytes, budget_bytes)
    if mode == "two_phase" and HWp % 128 != 0:
        HWp = _round_up(HW, 128)                  # HW-blocked tiles must be 128-aligned
        mode, tc, thw = _plan(N, C, HWp, elem_bytes, budget_bytes)

    # Contiguous NCHW -> (N, C, HW): free reshape; pad only if needed.
    x3 = x.reshape(N, C, HW)
    if HWp != HW:
        x3 = jnp.pad(x3, ((0, 0), (0, 0), (0, HWp - HW)))

    gamma = jnp.concatenate([bn_weight, in_weight]).astype(jnp.float32)   # (C,)
    beta = jnp.concatenate([bn_bias, in_bias]).astype(jnp.float32)        # (C,)

    if mode == "fused":
        params = jnp.stack([gamma, beta]).reshape(2, C, 1)
        kernel = functools.partial(_fused_kernel, c_half=c_half, tc=tc,
                                   true_hw=HW, true_n=N)
        out3 = pl.pallas_call(
            kernel,
            out_shape=jax.ShapeDtypeStruct((N, C, HWp), x.dtype),
            grid_spec=pltpu.PrefetchScalarGridSpec(
                num_scalar_prefetch=0,
                grid=(C // tc,),
                in_specs=[pl.BlockSpec((N, tc, HWp), lambda j: (0, j, 0)),
                          pl.BlockSpec((2, tc, 1), lambda j: (0, j, 0))],
                out_specs=pl.BlockSpec((N, tc, HWp), lambda j: (0, j, 0)),
            ),
            compiler_params=pltpu.CompilerParams(
                dimension_semantics=("parallel",),
                vmem_limit_bytes=vmem_limit,
            ),
        )(x3, params)
    else:
        # ---- Pass 1: per-(n, c) sums over HW tiles (reduction axis last, "arbitrary"). ----
        grid = (C // tc, HWp // thw)
        x_spec = pl.BlockSpec((N, tc, thw), lambda j, k: (0, j, k))
        stat_spec = pl.BlockSpec((N, tc, 1), lambda j, k: (0, j, 0))
        s1, s2 = pl.pallas_call(
            _stats_kernel,
            out_shape=(jax.ShapeDtypeStruct((N, C, 1), jnp.float32),
                       jax.ShapeDtypeStruct((N, C, 1), jnp.float32)),
            grid_spec=pltpu.PrefetchScalarGridSpec(
                num_scalar_prefetch=0,
                grid=grid,
                in_specs=[x_spec],
                out_specs=(stat_spec, stat_spec),
            ),
            compiler_params=pltpu.CompilerParams(
                dimension_semantics=("parallel", "arbitrary"),
                vmem_limit_bytes=vmem_limit,
            ),
        )(x3)

        # ---- Tiny (N, C) stats math in plain JAX. ----
        s1 = s1[..., 0]
        s2 = s2[..., 0]
        inv_hw = 1.0 / HW
        mean_in = s1 * inv_hw
        var_in = s2 * inv_hw - mean_in * mean_in
        inv_nhw = 1.0 / (N * HW)
        mean_bn = jnp.sum(s1, axis=0, keepdims=True) * inv_nhw
        var_bn = jnp.sum(s2, axis=0, keepdims=True) * inv_nhw - mean_bn * mean_bn
        m = (jnp.arange(C) < c_half).astype(jnp.float32)[None, :]
        mean = m * mean_bn + (1.0 - m) * mean_in
        var = jnp.maximum(m * var_bn + (1.0 - m) * var_in, 0.0)
        scale = gamma[None, :] * jax.lax.rsqrt(var + EPS)
        shift = beta[None, :] - mean * scale
        ss = jnp.stack([scale, shift]).reshape(2, N, C, 1)

        # ---- Pass 2: elementwise normalize. ----
        out3 = pl.pallas_call(
            _apply_kernel,
            out_shape=jax.ShapeDtypeStruct((N, C, HWp), x.dtype),
            grid_spec=pltpu.PrefetchScalarGridSpec(
                num_scalar_prefetch=0,
                grid=grid,
                in_specs=[x_spec,
                          pl.BlockSpec((2, N, tc, 1), lambda j, k: (0, 0, j, 0))],
                out_specs=x_spec,
            ),
            compiler_params=pltpu.CompilerParams(
                dimension_semantics=("parallel", "parallel"),
                vmem_limit_bytes=vmem_limit,
            ),
        )(x3, ss)

    if HWp != HW:
        out3 = out3[:, :, :HW]
    return out3.reshape(N, C, H, W)


# ---------------------------------------------------------------------------
# Reference & tests
# ---------------------------------------------------------------------------

def _reference(x, bn_weight, bn_bias, in_weight, in_bias):
    """Pure-JAX reference matching PyTorch training-mode forward."""
    N, C, H, W = x.shape
    c_half = C // 2
    x = x.astype(jnp.float32)
    x0, x1 = x[:, :c_half], x[:, c_half:]

    m0 = jnp.mean(x0, axis=(0, 2, 3), keepdims=True)
    v0 = jnp.mean((x0 - m0) ** 2, axis=(0, 2, 3), keepdims=True)
    y0 = (x0 - m0) / jnp.sqrt(v0 + EPS)
    y0 = y0 * bn_weight.reshape(1, c_half, 1, 1) + bn_bias.reshape(1, c_half, 1, 1)

    m1 = jnp.mean(x1, axis=(2, 3), keepdims=True)
    v1 = jnp.mean((x1 - m1) ** 2, axis=(2, 3), keepdims=True)
    y1 = (x1 - m1) / jnp.sqrt(v1 + EPS)
    y1 = y1 * in_weight.reshape(1, c_half, 1, 1) + in_bias.reshape(1, c_half, 1, 1)

    return jnp.concatenate([y0, y1], axis=1)


def _run_case(key, N, C, H, W, budget_bytes=None):
    k_x, k_w0, k_b0, k_w1, k_b1 = jax.random.split(key, 5)
    c_half = C // 2
    x = jax.random.normal(k_x, (N, C, H, W), dtype=jnp.float32)
    bn_w = 1.0 + 0.1 * jax.random.normal(k_w0, (c_half,), dtype=jnp.float32)
    bn_b = 0.1 * jax.random.normal(k_b0, (c_half,), dtype=jnp.float32)
    in_w = 1.0 + 0.1 * jax.random.normal(k_w1, (c_half,), dtype=jnp.float32)
    in_b = 0.1 * jax.random.normal(k_b1, (c_half,), dtype=jnp.float32)

    out = combine_norm2d(x, bn_w, bn_b, in_w, in_b, budget_bytes=budget_bytes)
    out = jax.block_until_ready(out)

    ref = _reference(x, bn_w, bn_b, in_w, in_b)
    assert out.shape == (N, C, H, W)
    assert jnp.allclose(out, ref, atol=1e-4, rtol=1e-4), "mismatch vs reference"


if __name__ == "__main__":
    key = jax.random.PRNGKey(0)
    k1, k2, k3, k4 = jax.random.split(key, 4)

    # 1) Module-spec shape: single full-C tile, BN/IN boundary handled by the in-kernel mask.
    _run_case(k1, N=2, C=4, H=16, W=16)

    # 2) Multi-step channel grid (tc=16 -> grid=(2,)): exercises program_id-based masking
    #    and the >=2-step preference that feeds both v7x TensorCores.
    _run_case(k2, N=2, C=32, H=16, W=16)

    # 3) Tiny VMEM budget forces the HW-blocked two-phase path (grid=(2, 2), thw=128).
    _run_case(k3, N=2, C=16, H=16, W=16, budget_bytes=64 * 1024)

    # 4) Non-multiple-of-128 spatial (HW=49): lane-dense zero-padding path.
    _run_case(k4, N=2, C=8, H=7, W=7)

    print("KERNEL_OK")
</pallas_src>

<mosaic_0001>
module attributes {stable_mosaic.version = 11 : i64} {
  func.func @_fused_kernel(%arg0: i32, %arg1: memref<2x4x256xf32, #tpu.memory_space<vmem>>, %arg2: memref<2x4x1xf32, #tpu.memory_space<vmem>>, %arg3: memref<2x4x256xf32, #tpu.memory_space<vmem>>) attributes {dimension_semantics = [#tpu.dimension_semantics<parallel>], iteration_bounds = array<i64: 1>, scalar_prefetch = 0 : i64, scratch_operands = 0 : i64, tpu.core_type = #tpu.core_type<tc>, window_params = [{transform_indices = @transform_0, window_bounds = array<i64: 2, 4, 256>}, {transform_indices = @transform_1, window_bounds = array<i64: 2, 4, 1>}, {transform_indices = @transform_2, window_bounds = array<i64: 2, 4, 256>}]} {
    %c0 = arith.constant 0 : index
    %c0_0 = arith.constant 0 : index
    %c0_1 = arith.constant 0 : index
    %0 = vector.load %arg1[%c0, %c0_0, %c0_1] : memref<2x4x256xf32, #tpu.memory_space<vmem>>, vector<2x4x256xf32>
    %cst = arith.constant dense<0.000000e+00> : vector<2x4xf32>
    %1 = vector.multi_reduction <add>, %0, %cst [2] : vector<2x4x256xf32> to vector<2x4xf32>
    %2 = vector.shape_cast %1 : vector<2x4xf32> to vector<2x4x1xf32>
    %3 = arith.mulf %0, %0 : vector<2x4x256xf32>
    %cst_2 = arith.constant dense<0.000000e+00> : vector<2x4xf32>
    %4 = vector.multi_reduction <add>, %3, %cst_2 [2] : vector<2x4x256xf32> to vector<2x4xf32>
    %5 = vector.shape_cast %4 : vector<2x4xf32> to vector<2x4x1xf32>
    %cst_3 = arith.constant 3.906250e-03 : f32
    %6 = vector.broadcast %cst_3 : f32 to vector<2x4x1xf32>
    %7 = arith.mulf %2, %6 : vector<2x4x1xf32>
    %cst_4 = arith.constant 3.906250e-03 : f32
    %8 = vector.broadcast %cst_4 : f32 to vector<2x4x1xf32>
    %9 = arith.mulf %5, %8 : vector<2x4x1xf32>
    %10 = arith.mulf %7, %7 : vector<2x4x1xf32>
    %11 = arith.subf %9, %10 : vector<2x4x1xf32>
    %cst_5 = arith.constant dense<0.000000e+00> : vector<4x1xf32>
    %12 = vector.multi_reduction <add>, %2, %cst_5 [0] : vector<2x4x1xf32> to vector<4x1xf32>
    %13 = vector.shape_cast %12 : vector<4x1xf32> to vector<1x4x1xf32>
    %cst_6 = arith.constant 0.001953125 : f32
    %14 = vector.broadcast %cst_6 : f32 to vector<1x4x1xf32>
    %15 = arith.mulf %13, %14 : vector<1x4x1xf32>
    %cst_7 = arith.constant dense<0.000000e+00> : vector<4x1xf32>
    %16 = vector.multi_reduction <add>, %5, %cst_7 [0] : vector<2x4x1xf32> to vector<4x1xf32>
    %17 = vector.shape_cast %16 : vector<4x1xf32> to vector<1x4x1xf32>
    %cst_8 = arith.constant 0.001953125 : f32
    %18 = vector.broadcast %cst_8 : f32 to vector<1x4x1xf32>
    %19 = arith.mulf %17, %18 : vector<1x4x1xf32>
    %20 = arith.mulf %15, %15 : vector<1x4x1xf32>
    %21 = arith.subf %19, %20 : vector<1x4x1xf32>
    %c4_i32 = arith.constant 4 : i32
    %22 = arith.muli %arg0, %c4_i32 : i32
    %23 = tpu.iota {dimensions = array<i32: 1>} : vector<1x4x1xi32>
    %24 = vector.broadcast %22 : i32 to vector<1x4x1xi32>
    %25 = arith.addi %24, %23 : vector<1x4x1xi32>
    %c2_i32 = arith.constant 2 : i32
    %26 = vector.broadcast %c2_i32 : i32 to vector<1x4x1xi32>
    %27 = arith.cmpi slt, %25, %26 : vector<1x4x1xi32>
    %28 = arith.extui %27 : vector<1x4x1xi1> to vector<1x4x1xi32>
    %29 = arith.sitofp %28 : vector<1x4x1xi32> to vector<1x4x1xf32>
    %30 = arith.mulf %29, %15 : vector<1x4x1xf32>
    %cst_9 = arith.constant 1.000000e+00 : f32
    %31 = vector.broadcast %cst_9 : f32 to vector<1x4x1xf32>
    %32 = arith.subf %31, %29 : vector<1x4x1xf32>
    %33 = vector.broadcast %32 : vector<1x4x1xf32> to vector<2x4x1xf32>
    %34 = arith.mulf %33, %7 : vector<2x4x1xf32>
    %35 = vector.broadcast %30 : vector<1x4x1xf32> to vector<2x4x1xf32>
    %36 = arith.addf %35, %34 : vector<2x4x1xf32>
    %37 = arith.mulf %29, %21 : vector<1x4x1xf32>
    %cst_10 = arith.constant 1.000000e+00 : f32
    %38 = vector.broadcast %cst_10 : f32 to vector<1x4x1xf32>
    %39 = arith.subf %38, %29 : vector<1x4x1xf32>
    %40 = vector.broadcast %39 : vector<1x4x1xf32> to vector<2x4x1xf32>
    %41 = arith.mulf %40, %11 : vector<2x4x1xf32>
    %42 = vector.broadcast %37 : vector<1x4x1xf32> to vector<2x4x1xf32>
    %43 = arith.addf %42, %41 : vector<2x4x1xf32>
    %cst_11 = arith.constant 0.000000e+00 : f32
    %44 = vector.broadcast %cst_11 : f32 to vector<2x4x1xf32>
    %45 = arith.maximumf %43, %44 : vector<2x4x1xf32>
    %c0_12 = arith.constant 0 : index
    %c0_13 = arith.constant 0 : index
    %c0_14 = arith.constant 0 : index
    %46 = vector.load %arg2[%c0_12, %c0_13, %c0_14] : memref<2x4x1xf32, #tpu.memory_space<vmem>>, vector<2x4x1xf32>
    %47 = vector.extract_strided_slice %46 {offsets = [0, 0, 0], sizes = [1, 4, 1], strides = [1, 1, 1]} : vector<2x4x1xf32> to vector<1x4x1xf32>
    %48 = vector.extract_strided_slice %46 {offsets = [1, 0, 0], sizes = [1, 4, 1], strides = [1, 1, 1]} : vector<2x4x1xf32> to vector<1x4x1xf32>
    %cst_15 = arith.constant 9.99999974E-6 : f32
    %49 = vector.broadcast %cst_15 : f32 to vector<2x4x1xf32>
    %50 = arith.addf %45, %49 : vector<2x4x1xf32>
    %51 = math.rsqrt %50 : vector<2x4x1xf32>
    %52 = vector.broadcast %47 : vector<1x4x1xf32> to vector<2x4x1xf32>
    %53 = arith.mulf %52, %51 : vector<2x4x1xf32>
    %54 = arith.mulf %36, %53 : vector<2x4x1xf32>
    %55 = vector.broadcast %48 : vector<1x4x1xf32> to vector<2x4x1xf32>
    %56 = arith.subf %55, %54 : vector<2x4x1xf32>
    %57 = vector.broadcast %53 : vector<2x4x1xf32> to vector<2x4x256xf32>
    %58 = arith.mulf %0, %57 : vector<2x4x256xf32>
    %59 = vector.broadcast %56 : vector<2x4x1xf32> to vector<2x4x256xf32>
    %60 = arith.addf %58, %59 : vector<2x4x256xf32>
    %c0_16 = arith.constant 0 : index
    %c0_17 = arith.constant 0 : index
    %c0_18 = arith.constant 0 : index
    %61 = vector.load %arg3[%c0_16, %c0_17, %c0_18] : memref<2x4x256xf32, #tpu.memory_space<vmem>>, vector<2x4x256xf32>
    tpu.vector_store %arg3[%c0_16, %c0_17, %c0_18], %60 {strides = array<i32>} : memref<2x4x256xf32, #tpu.memory_space<vmem>>, vector<2x4x256xf32>,
    return
  }
  func.func @transform_0(%arg0: i32) -> (i32, i32, i32) {
    %c0_i32 = arith.constant 0 : i32
    %c0_i32_0 = arith.constant 0 : i32
    %c0_i32_1 = arith.constant 0 : i32
    return %c0_i32, %arg0, %c0_i32_0 : i32, i32, i32
  }
  func.func @transform_1(%arg0: i32) -> (i32, i32, i32) {
    %c0_i32 = arith.constant 0 : i32
    %c0_i32_0 = arith.constant 0 : i32
    %c0_i32_1 = arith.constant 0 : i32
    return %c0_i32, %arg0, %c0_i32_0 : i32, i32, i32
  }
  func.func @transform_2(%arg0: i32) -> (i32, i32, i32) {
    %c0_i32 = arith.constant 0 : i32
    %c0_i32_0 = arith.constant 0 : i32
    %c0_i32_1 = arith.constant 0 : i32
    return %c0_i32, %arg0, %c0_i32_0 : i32, i32, i32
  }
}

</mosaic_0001>

<llo_original>
// kernel: tpu_custom_call.1
$region0: #{tpu_custom_call.1}
  #allocation0 [shape = 'u32[]', space=smem, size = 0x4, offset = 0x4, fixed_abs, tag = 'smem constant byte address 0x4 - core index']
  #allocation1 [shape = 'u32[144,128]{1,0:T(1,128)}', space=vmem, size = 0x12000, scoped, tag = 'internal scratch']
  %s0 = inlined_call_operand.hbm [shape: f32[2,4,256], index: 0, kind: input, shape index: {}]
  %s1 = inlined_call_operand.vmem [shape: f32[2,4,1], index: 1, kind: input, shape index: {}]
  %s2 = inlined_call_operand.hbm [shape: f32[2,4,256], index: 2, kind: output, shape index: {}]
  %s3 = sld [smem:[#allocation0]]
  $region22: #{tpu_custom_call.1} parent=0
    _
  %s5 = ssub.s32 1, %s3
  %s6 = scalar_select 0, %s5, %s3
  $region1: #{tpu_custom_call.1} parent=0
    #allocation2 [shape = 'u8[8192]{0}', space=vmem, size = 0x2000, scoped, tag = 'input window, operand 0, single buffered']
    #allocation3 [shape = 's32[1]{0}', space=sflag, size = 0x4, scoped, tag = 'scoped memory for tpu_custom_call.1']
    #allocation4 [shape = 's32[1]{0}', space=sflag, size = 0x4, scoped, tag = 'scoped memory for tpu_custom_call.1']
    #allocation5 [shape = 'u8[8192]{0}', space=vmem, size = 0x2000, scoped, tag = 'output window, operand 0, single buffered']
    %7 = vsyncpa [#allocation3], 0
    %8 = vsyncpa [#allocation4], 0
    // Predicated region
    $region2: #{tpu_custom_call.1} parent=1 // pred_check
      _
    $region3: #{tpu_custom_call.1} parent=1 // pred_check_branch
      %10 = sbr.rel (0) target = $region5
    $region4: #{tpu_custom_call.1} parent=1 // pred_region
      %s12 = ssub.s32 256, 256
      %13 = vsyncadd [#allocation3], %s12
      %s14 = sshll.u32 [#allocation2], 4
      %s15 = int_to_ptr.vmem [resolvable:$true] %s14
      %20 = dma.hbm_to_vmem [thread:$0]  %s0, 256, %s15, [#allocation3], 128, 128, 8
    $region5: #{tpu_custom_call.1} parent=1 // pred_fallthru
      _
    // Predicated region
    $region6: #{tpu_custom_call.1} parent=1 // pred_check
      _
    $region7: #{tpu_custom_call.1} parent=1 // pred_check_branch
      %22 = sbr.rel (0) target = $region9
    $region8: #{tpu_custom_call.1} parent=1 // pred_region
      _
    $region9: #{tpu_custom_call.1} parent=1 // pred_fallthru
      _
    // Predicated region
    $region10: #{tpu_custom_call.1} parent=1 // pred_check
      _
    $region11: #{tpu_custom_call.1} parent=1 // pred_check_branch
      %24 = sbr.rel (0) target = $region13
    $region12: #{tpu_custom_call.1} parent=1 // pred_region
      %25 = dma.done [#allocation3], 256
    $region13: #{tpu_custom_call.1} parent=1 // pred_fallthru
      _
    %v26 = vld [vmem:[#allocation2] sm:$0xff]
    %v27 = vld [vmem:[#allocation2 + $0x8] sm:$0xff]
    %v30 = vcombine.high %v26, %v26
    %v31 = vcombine.high %v27, %v27
    %vm34 = vcmask 1043456
    %v35 = vsel %vm34, %v26, 0.0
    %v36 = vsel %vm34, %v30, 0.0
    %v37 = vadd.f32 %v35, %v36
    %38 = vadd.xlane.f32.xlu0 %v37
    %v39 = vpop.xlane.xlu0 %38
    %v40 = vsel %vm34, %v27, 0.0
    %v41 = vsel %vm34, %v31, 0.0
    %v42 = vadd.f32 %v40, %v41
    %43 = vadd.xlane.f32.xlu0 %v42
    %v44 = vpop.xlane.xlu0 %43
    %v45 = vmul.f32 %v26, %v26
    %v46 = vmul.f32 %v27, %v27
    %v49 = vcombine.high %v45, %v45
    %v50 = vcombine.high %v46, %v46
    %v53 = vsel %vm34, %v45, 0.0
    %v54 = vsel %vm34, %v49, 0.0
    %v55 = vadd.f32 %v53, %v54
    %56 = vadd.xlane.f32.xlu0 %v55
    %v57 = vpop.xlane.xlu0 %56
    %v58 = vsel %vm34, %v46, 0.0
    %v59 = vsel %vm34, %v50, 0.0
    %v60 = vadd.f32 %v58, %v59
    %61 = vadd.xlane.f32.xlu0 %v60
    %v62 = vpop.xlane.xlu0 %61
    %v63 = vmul.f32 %v39, 0.00390625
    %v64 = vmul.f32 %v44, 0.00390625
    %v65 = vmul.f32 %v57, 0.00390625
    %v66 = vmul.f32 %v62, 0.00390625
    %v67 = vmul.f32 %v63, %v63
    %v68 = vmul.f32 %v64, %v64
    %v69 = vsub.f32 %v65, %v67
    %v70 = vsub.f32 %v66, %v68
    %v71 = vsel %vm34, %v39, 0.0
    %v72 = vsel %vm34, %v44, 0.0
    %v73 = vadd.f32 %v71, %v72
    %v74 = vmul.f32 %v73, 0.001953125
    %v75 = vsel %vm34, %v57, 0.0
    %v76 = vsel %vm34, %v62, 0.0
    %v77 = vadd.f32 %v75, %v76
    %v78 = vmul.f32 %v77, 0.001953125
    %v79 = vmul.f32 %v74, %v74
    %v80 = vsub.f32 %v78, %v79
    %s81 = smul.u32 0, 4
    %v82 = vlaneseq
    %v83 = vshrl.u32 %v82, 7
    %v84 = vstv %s81
    %v85 = vadd.s32 %v84, %v83
    %vm86 = vcmp.lt.s32.totalorder %v85, 2
    %v87 = vsel %vm86, 1, 0
    %v88 = vcvt.s32.f32 %v87
    %v89 = vmul.f32 %v88, %v74
    %v90 = vsub.f32 1.0, %v88
    %v91 = vmul.f32 %v90, %v63
    %v92 = vmul.f32 %v90, %v64
    %v93 = vadd.f32 %v89, %v91
    %v94 = vadd.f32 %v89, %v92
    %v95 = vmul.f32 %v88, %v80
    %v96 = vmul.f32 %v90, %v69
    %v97 = vmul.f32 %v90, %v70
    %v98 = vadd.f32 %v95, %v96
    %v99 = vadd.f32 %v95, %v97
    %v100 = vmax.f32 %v98, 0.0
    %v101 = vmax.f32 %v99, 0.0
    %v102 = vld [vmem:[%s1] sm:$0xf]
    %v103 = vld [vmem:[%s1 + $0x4] sm:$0xf]
    %v104 = vadd.f32 %v100, 1e-05
    %v105 = vadd.f32 %v101, 1e-05
    %v106 = vrsqrt.pop %v104
    %v107 = vrsqrt.pop %v105
    %v108 = vmul.f32 %v102, %v106
    %v109 = vmul.f32 %v102, %v107
    %v110 = vmul.f32 %v93, %v108
    %v111 = vmul.f32 %v94, %v109
    %v112 = vsub.f32 %v103, %v110
    %v113 = vsub.f32 %v103, %v111
    %115 = vset.pattern.permute.xlu0 0
    %116 = vperm.xlu0 %115, %v108
    %v117 = vpop.permute.xlu0 %116
    %119 = vset.pattern.permute.xlu0 0
    %120 = vperm.xlu0 %119, %v109
    %v121 = vpop.permute.xlu0 %120
    %v123 = vunpack.c.l.s4 839922192
    %v124 = vunpack.c.0.s8 %v123
    %v125 = vlaneseq
    %v126 = vshrl.u32 %v125, 7
    %v127 = vsub.s32 %v124, %v126
    %v128 = vrot.slane %v117, %v127
    %v130 = vunpack.c.l.s4 839922192
    %v131 = vunpack.c.0.s8 %v130
    %v132 = vlaneseq
    %v133 = vshrl.u32 %v132, 7
    %v134 = vsub.s32 %v131, %v133
    %v135 = vrot.slane %v121, %v134
    %v138 = vmul.f32 %v26, %v128
    %v139 = vmul.f32 %v27, %v135
    %141 = vset.pattern.permute.xlu0 0
    %142 = vperm.xlu0 %141, %v112
    %v143 = vpop.permute.xlu0 %142
    %145 = vset.pattern.permute.xlu0 0
    %146 = vperm.xlu0 %145, %v113
    %v147 = vpop.permute.xlu0 %146
    %v149 = vunpack.c.l.s4 839922192
    %v150 = vunpack.c.0.s8 %v149
    %v151 = vlaneseq
    %v152 = vshrl.u32 %v151, 7
    %v153 = vsub.s32 %v150, %v152
    %v154 = vrot.slane %v143, %v153
    %v156 = vunpack.c.l.s4 839922192
    %v157 = vunpack.c.0.s8 %v156
    %v158 = vlaneseq
    %v159 = vshrl.u32 %v158, 7
    %v160 = vsub.s32 %v157, %v159
    %v161 = vrot.slane %v147, %v160
    %v164 = vadd.f32 %v138, %v154
    %v165 = vadd.f32 %v139, %v161
    %166 = vst [vmem:[#allocation5] sm:$0xff] %v164
    %167 = vst [vmem:[#allocation5 + $0x8] sm:$0xff] %v165
    // Predicated region
    $region14: #{tpu_custom_call.1} parent=1 // pred_check
      _
    $region15: #{tpu_custom_call.1} parent=1 // pred_check_branch
      %169 = sbr.rel (0) target = $region17
    $region16: #{tpu_custom_call.1} parent=1 // pred_region
      %s171 = ssub.s32 256, 256
      %172 = vsyncadd [#allocation4], %s171
      %s173 = sshll.u32 [#allocation5], 4
      %s174 = int_to_ptr.vmem [resolvable:$true] %s173
      %179 = dma.vmem_to_hbm [thread:$0]  %s174, 256, %s2, [#allocation4], 128, 128, 8
    $region17: #{tpu_custom_call.1} parent=1 // pred_fallthru
      _
    // Predicated region
    $region18: #{tpu_custom_call.1} parent=1 // pred_check
      _
    $region19: #{tpu_custom_call.1} parent=1 // pred_check_branch
      %181 = sbr.rel (0) target = $region21
    $region20: #{tpu_custom_call.1} parent=1 // pred_region
      %182 = dma.done [#allocation4], 256
    $region21: #{tpu_custom_call.1} parent=1 // pred_fallthru
      _
    %183 = vsyncpa [#allocation3], 1
    %184 = vsyncpa [#allocation4], 1

</llo_original>
